<compile_context>
chip_gen: v7x
topology: tpu7x:2x2x1
jax: 0.10.0
libtpu: 0.0.40
codegen_flags: <defaults>
</compile_context>

<pallas_src>
import functools

import jax
import jax.numpy as jnp
from jax.experimental import pallas as pl
from jax.experimental.pallas import tpu as pltpu


def _round_up(v, m):
    return ((v + m - 1) // m) * m


def _critic_rnn_kernel(use_relu, hidden_dim, ew_dtype,
                       x_ref, h_prev_ref,
                       w1_ref, b1_ref,
                       wg_ref, bg_ref,
                       wheads_ref, bheads_ref,
                       heads_ref, h_new_ref):
    H = hidden_dim
    act = (lambda v: jnp.maximum(v, 0.0)) if use_relu else jnp.tanh

    x = x_ref[...]                                   # [TB, Din] (compute dtype)
    h_prev = h_prev_ref[...]                         # [TB, H]   (compute dtype)

    # fc1 + activation (MXU with f32 accumulation; tanh goes to the EUP slot).
    h1 = act(jnp.dot(x, w1_ref[...], preferred_element_type=jnp.float32)
             + b1_ref[...])                                            # [TB, H] f32

    # --- Fused GRUCell: single [TB, 2H] @ [2H, 4H] MXU pass. -----------------
    # Packed columns: [ r(ih+hh) | z(ih+hh) | n_ih | n_hh ]; the r/z column
    # blocks stack W_ih over W_hh along the rows, so their products arrive
    # pre-summed.  With H=32 the output is exactly 128 lanes (lane-dense).
    hx = jnp.concatenate([h1.astype(wg_ref.dtype), h_prev], axis=1)    # [TB, 2H]
    g = (jnp.dot(hx, wg_ref[...], preferred_element_type=jnp.float32)
         + bg_ref[...])                                                # [TB, 4H] f32

    # Gate elementwise math.  Default f32 (safe on v5e); bf16 on v6e/v7x halves
    # vreg / load-store pressure for the [TB, 4H] intermediate.
    g = g.astype(ew_dtype)
    h_prev_ew = h_prev.astype(ew_dtype)
    one = jnp.asarray(1, ew_dtype)
    r = jax.nn.sigmoid(g[:, 0:H])
    z = jax.nn.sigmoid(g[:, H:2 * H])
    n = jnp.tanh(g[:, 2 * H:3 * H] + r * g[:, 3 * H:4 * H])
    h_new = ((one - z) * n + z * h_prev_ew).astype(jnp.float32)        # [TB, H]

    # Fused value/cost heads: one [TB, 2] matmul + single store (fc2 | fc4).
    heads = (jnp.dot(h_new.astype(wheads_ref.dtype), wheads_ref[...],
                     preferred_element_type=jnp.float32) + bheads_ref[...])

    h_new_ref[...] = h_new.astype(h_new_ref.dtype)
    heads_ref[...] = heads.astype(heads_ref.dtype)


def pack_params(raw, compute_dtype=jnp.float32):
    """Pack GRU weights and cast everything ONCE (call outside the step loop).

    compute_dtype=jnp.bfloat16 halves weight HBM traffic / MXU passes on
    v6e/v7x; biases stay f32 (added after f32 accumulation).
    """
    H = raw["b1"].shape[1]
    w_ih, w_hh = raw["w_ih"], raw["w_hh"]        # [H, 3H] each ("x @ W" layout)
    b_ih, b_hh = raw["b_ih"], raw["b_hh"]        # [1, 3H]
    zeros = jnp.zeros((H, H), jnp.float32)
    # rows: [ h1 ; h_prev ], columns: [ r | z | n_ih | n_hh ]
    top = jnp.concatenate(
        [w_ih[:, 0:H], w_ih[:, H:2 * H], w_ih[:, 2 * H:3 * H], zeros], axis=1)
    bot = jnp.concatenate(
        [w_hh[:, 0:H], w_hh[:, H:2 * H], zeros, w_hh[:, 2 * H:3 * H]], axis=1)
    w_gru = jnp.concatenate([top, bot], axis=0)                        # [2H, 4H]
    b_gru = jnp.concatenate(
        [b_ih[:, 0:H] + b_hh[:, 0:H],
         b_ih[:, H:2 * H] + b_hh[:, H:2 * H],
         b_ih[:, 2 * H:3 * H],
         b_hh[:, 2 * H:3 * H]], axis=1)                                # [1, 4H]
    return {
        "w1": raw["w1"].astype(compute_dtype),
        "b1": raw["b1"].astype(jnp.float32),
        "w_gru": w_gru.astype(compute_dtype),
        "b_gru": b_gru.astype(jnp.float32),
        "w_heads": raw["w_heads"].astype(compute_dtype),
        "b_heads": raw["b_heads"].astype(jnp.float32),
    }


def critic_rnn_forward(critic_input, rnn_hidden, packed, *,
                       use_relu=False, tile_batch=1024,
                       elementwise_dtype=jnp.float32):
    """One Critic_RNN step.

    critic_input: [B, Din] f32
    rnn_hidden:   [B, H]   f32  (previous GRU hidden; zeros == PyTorch None)
    packed:       output of pack_params() (already in compute dtype)
    Returns (value [B, 1], cost [B, 1], new_rnn_hidden [B, H]).
    """
    B, Din = critic_input.shape
    H = rnn_hidden.shape[1]
    compute_dtype = packed["w1"].dtype

    x = critic_input.astype(compute_dtype)
    h_prev = rnn_hidden.astype(compute_dtype)

    # Batch tile: as large as possible (amortizes ~0.35 µs/grid-step), but for
    # large batches keep >= 4 grid steps so the "parallel" axis shards across
    # v7x's 2 TensorCores and each core still has >= 2 steps to pipeline.
    # (v5e/v6e are single-TC; larger TB is strictly better there too, and VMEM
    # is never the constraint at these sizes.)
    TB = min(tile_batch, B)
    if B >= 512:
        TB = min(TB, max(128, _round_up(pl.cdiv(B, 4), 16)))
    grid = (pl.cdiv(B, TB),)

    def row_spec(cols):
        return pl.BlockSpec((TB, cols), lambda i: (i, 0))

    def const_spec(shape):
        return pl.BlockSpec(shape, lambda i: (0, 0))   # weights stay VMEM-resident

    weight_bytes = sum(v.nbytes for v in packed.values())
    transcendentals = 3 * B * H + (0 if use_relu else B * H)
    cost_estimate = pl.CostEstimate(
        flops=2 * B * (Din * H + 2 * H * 4 * H + H * 2),
        transcendentals=transcendentals,
        bytes_accessed=(x.dtype.itemsize * B * Din
                        + h_prev.dtype.itemsize * B * H
                        + 4 * B * (H + 2)
                        + weight_bytes),
    )

    kernel = functools.partial(_critic_rnn_kernel, use_relu, H, elementwise_dtype)
    heads, h_new = pl.pallas_call(
        kernel,
        out_shape=(jax.ShapeDtypeStruct((B, 2), jnp.float32),
                   jax.ShapeDtypeStruct((B, H), jnp.float32)),
        grid=grid,
        in_specs=[
            row_spec(Din),                 # x
            row_spec(H),                   # h_prev
            const_spec((Din, H)),          # w1
            const_spec((1, H)),            # b1
            const_spec((2 * H, 4 * H)),    # packed GRU weight
            const_spec((1, 4 * H)),        # packed GRU bias
            const_spec((H, 2)),            # w_heads (fc2 | fc4)
            const_spec((1, 2)),            # b_heads
        ],
        out_specs=(row_spec(2), row_spec(H)),
        compiler_params=pltpu.CompilerParams(
            dimension_semantics=("parallel",)),
        cost_estimate=cost_estimate,
    )(x, h_prev, packed["w1"], packed["b1"], packed["w_gru"], packed["b_gru"],
      packed["w_heads"], packed["b_heads"])

    value = heads[:, 0:1]
    cost = heads[:, 1:2]
    return value, cost, h_new


def init_params(key, critic_input_dim, rnn_hidden_dim):
    """Orthogonal weights (gain=1.0), zero biases; matches orthogonal_init()."""
    H = rnn_hidden_dim
    k1, k2, k3, k4, k5 = jax.random.split(key, 5)
    ortho = jax.nn.initializers.orthogonal(scale=1.0)
    # Orthogonal init applied in PyTorch layouts ([out, in] for Linear,
    # [3H, in] for GRUCell), then transposed to [in, out] for x @ W kernels.
    w1 = jnp.transpose(ortho(k1, (H, critic_input_dim), jnp.float32))
    w_ih = jnp.transpose(ortho(k2, (3 * H, H), jnp.float32))
    w_hh = jnp.transpose(ortho(k3, (3 * H, H), jnp.float32))
    w2 = jnp.transpose(ortho(k4, (1, H), jnp.float32))   # fc2 (value head)
    w4 = jnp.transpose(ortho(k5, (1, H), jnp.float32))   # fc4 (cost head)
    return {
        "w1": w1, "b1": jnp.zeros((1, H), jnp.float32),
        "w_ih": w_ih, "b_ih": jnp.zeros((1, 3 * H), jnp.float32),
        "w_hh": w_hh, "b_hh": jnp.zeros((1, 3 * H), jnp.float32),
        "w_heads": jnp.concatenate([w2, w4], axis=1),     # [H, 2]
        "b_heads": jnp.zeros((1, 2), jnp.float32),
    }


def _reference_forward(x, h_prev, params, *, use_relu=False):
    act = (lambda v: jnp.maximum(v, 0.0)) if use_relu else jnp.tanh
    H = h_prev.shape[1]
    h1 = act(x @ params["w1"] + params["b1"])
    gi = h1 @ params["w_ih"] + params["b_ih"]
    gh = h_prev @ params["w_hh"] + params["b_hh"]
    r = jax.nn.sigmoid(gi[:, 0:H] + gh[:, 0:H])
    z = jax.nn.sigmoid(gi[:, H:2 * H] + gh[:, H:2 * H])
    n = jnp.tanh(gi[:, 2 * H:3 * H] + r * gh[:, 2 * H:3 * H])
    h_new = (1.0 - z) * n + z * h_prev
    heads = h_new @ params["w_heads"] + params["b_heads"]
    return heads[:, 0:1], heads[:, 1:2], h_new


if __name__ == "__main__":
    key = jax.random.PRNGKey(0)
    kx, kp = jax.random.split(key)

    batch = 8                 # n_threads * n_agents flattened
    critic_input_dim = 48
    rnn_hidden_dim = 32       # args.rnn_hidden_dim
    use_relu = False          # args.use_relu = 0 -> Tanh

    x = jax.random.normal(kx, (batch, critic_input_dim), jnp.float32)
    raw_params = init_params(kp, critic_input_dim, rnn_hidden_dim)
    # Pack + cast ONCE, outside the per-step call (hoisted weight conversion).
    packed = pack_params(raw_params, compute_dtype=jnp.float32)

    # Step 1: initial hidden state is zeros (PyTorch rnn_hidden=None).
    h0 = jnp.zeros((batch, rnn_hidden_dim), jnp.float32)
    value1, cost1, h1 = critic_rnn_forward(x, h0, packed, use_relu=use_relu)
    # Step 2: feed the new hidden back (exercises w_hh / recurrence).
    value2, cost2, h2 = critic_rnn_forward(x, h1, packed, use_relu=use_relu)
    jax.block_until_ready((value1, cost1, h1, value2, cost2, h2))

    rv1, rc1, rh1 = _reference_forward(x, h0, raw_params, use_relu=use_relu)
    rv2, rc2, rh2 = _reference_forward(x, rh1, raw_params, use_relu=use_relu)

    assert value1.shape == (batch, 1) and cost1.shape == (batch, 1)
    assert h1.shape == (batch, rnn_hidden_dim)
    assert jnp.allclose(value1, rv1, atol=1e-5, rtol=1e-5)
    assert jnp.allclose(cost1, rc1, atol=1e-5, rtol=1e-5)
    assert jnp.allclose(h1, rh1, atol=1e-5, rtol=1e-5)
    assert jnp.allclose(value2, rv2, atol=1e-5, rtol=1e-5)
    assert jnp.allclose(cost2, rc2, atol=1e-5, rtol=1e-5)
    assert jnp.allclose(h2, rh2, atol=1e-5, rtol=1e-5)

    print("KERNEL_OK")
</pallas_src>

<mosaic_0001>
module attributes {stable_mosaic.version = 11 : i64} {
  func.func @_critic_rnn_kernel(%arg0: i32, %arg1: memref<8x48xf32, #tpu.memory_space<vmem>>, %arg2: memref<8x32xf32, #tpu.memory_space<vmem>>, %arg3: memref<48x32xf32, #tpu.memory_space<vmem>>, %arg4: memref<1x32xf32, #tpu.memory_space<vmem>>, %arg5: memref<64x128xf32, #tpu.memory_space<vmem>>, %arg6: memref<1x128xf32, #tpu.memory_space<vmem>>, %arg7: memref<32x2xf32, #tpu.memory_space<vmem>>, %arg8: memref<1x2xf32, #tpu.memory_space<vmem>>, %arg9: memref<8x2xf32, #tpu.memory_space<vmem>>, %arg10: memref<8x32xf32, #tpu.memory_space<vmem>>) attributes {dimension_semantics = [#tpu.dimension_semantics<parallel>], iteration_bounds = array<i64: 1>, scalar_prefetch = 0 : i64, scratch_operands = 0 : i64, tpu.core_type = #tpu.core_type<tc>, window_params = [{transform_indices = @transform_0, window_bounds = array<i64: 8, 48>}, {transform_indices = @transform_1, window_bounds = array<i64: 8, 32>}, {pipeline_mode = #tpu.pipeline_mode<synchronous>, transform_indices = @transform_2, window_bounds = array<i64: 48, 32>}, {pipeline_mode = #tpu.pipeline_mode<synchronous>, transform_indices = @transform_3, window_bounds = array<i64: 1, 32>}, {pipeline_mode = #tpu.pipeline_mode<synchronous>, transform_indices = @transform_4, window_bounds = array<i64: 64, 128>}, {pipeline_mode = #tpu.pipeline_mode<synchronous>, transform_indices = @transform_5, window_bounds = array<i64: 1, 128>}, {pipeline_mode = #tpu.pipeline_mode<synchronous>, transform_indices = @transform_6, window_bounds = array<i64: 32, 2>}, {pipeline_mode = #tpu.pipeline_mode<synchronous>, transform_indices = @transform_7, window_bounds = array<i64: 1, 2>}, {transform_indices = @transform_8, window_bounds = array<i64: 8, 2>}, {transform_indices = @transform_9, window_bounds = array<i64: 8, 32>}]} {
    %c0 = arith.constant 0 : index
    %c0_0 = arith.constant 0 : index
    %0 = vector.load %arg1[%c0, %c0_0] : memref<8x48xf32, #tpu.memory_space<vmem>>, vector<8x48xf32>
    %c0_1 = arith.constant 0 : index
    %c0_2 = arith.constant 0 : index
    %1 = vector.load %arg2[%c0_1, %c0_2] : memref<8x32xf32, #tpu.memory_space<vmem>>, vector<8x32xf32>
    %c0_3 = arith.constant 0 : index
    %c0_4 = arith.constant 0 : index
    %2 = vector.load %arg3[%c0_3, %c0_4] : memref<48x32xf32, #tpu.memory_space<vmem>>, vector<48x32xf32>
    %cst = arith.constant dense<0.000000e+00> : vector<8x32xf32>
    %3 = tpu.matmul %0, %2, %cst {dimension_numbers = #tpu.dot_dimension_numbers<[1], [0], [0], [1], [0, 0, 1, 1], [], []>} : vector<8x48xf32>, vector<48x32xf32>, vector<8x32xf32> -> vector<8x32xf32>
    %c0_5 = arith.constant 0 : index
    %c0_6 = arith.constant 0 : index
    %4 = vector.load %arg4[%c0_5, %c0_6] : memref<1x32xf32, #tpu.memory_space<vmem>>, vector<1x32xf32>
    %5 = vector.broadcast %4 : vector<1x32xf32> to vector<8x32xf32>
    %6 = arith.addf %3, %5 : vector<8x32xf32>
    %7 = math.tanh %6 : vector<8x32xf32>
    %8 = tpu.concatenate %7, %1 in 1 : vector<8x32xf32>, vector<8x32xf32> -> vector<8x64xf32>
    %c0_7 = arith.constant 0 : index
    %c0_8 = arith.constant 0 : index
    %9 = vector.load %arg5[%c0_7, %c0_8] : memref<64x128xf32, #tpu.memory_space<vmem>>, vector<64x128xf32>
    %cst_9 = arith.constant dense<0.000000e+00> : vector<8x128xf32>
    %10 = tpu.matmul %8, %9, %cst_9 {dimension_numbers = #tpu.dot_dimension_numbers<[1], [0], [0], [1], [0, 0, 1, 1], [], []>} : vector<8x64xf32>, vector<64x128xf32>, vector<8x128xf32> -> vector<8x128xf32>
    %c0_10 = arith.constant 0 : index
    %c0_11 = arith.constant 0 : index
    %11 = vector.load %arg6[%c0_10, %c0_11] : memref<1x128xf32, #tpu.memory_space<vmem>>, vector<1x128xf32>
    %12 = vector.broadcast %11 : vector<1x128xf32> to vector<8x128xf32>
    %13 = arith.addf %10, %12 : vector<8x128xf32>
    %14 = vector.extract_strided_slice %13 {offsets = [0, 0], sizes = [8, 32], strides = [1, 1]} : vector<8x128xf32> to vector<8x32xf32>
    %15 = arith.negf %14 : vector<8x32xf32>
    %16 = math.exp %15 : vector<8x32xf32>
    %cst_12 = arith.constant 1.000000e+00 : f32
    %17 = vector.broadcast %cst_12 : f32 to vector<8x32xf32>
    %18 = arith.addf %17, %16 : vector<8x32xf32>
    %19 = arith.divf %17, %18 : vector<8x32xf32>
    %20 = vector.extract_strided_slice %13 {offsets = [0, 32], sizes = [8, 32], strides = [1, 1]} : vector<8x128xf32> to vector<8x32xf32>
    %21 = arith.negf %20 : vector<8x32xf32>
    %22 = math.exp %21 : vector<8x32xf32>
    %cst_13 = arith.constant 1.000000e+00 : f32
    %23 = vector.broadcast %cst_13 : f32 to vector<8x32xf32>
    %24 = arith.addf %23, %22 : vector<8x32xf32>
    %25 = arith.divf %23, %24 : vector<8x32xf32>
    %26 = vector.extract_strided_slice %13 {offsets = [0, 64], sizes = [8, 32], strides = [1, 1]} : vector<8x128xf32> to vector<8x32xf32>
    %27 = vector.extract_strided_slice %13 {offsets = [0, 96], sizes = [8, 32], strides = [1, 1]} : vector<8x128xf32> to vector<8x32xf32>
    %28 = arith.mulf %19, %27 : vector<8x32xf32>
    %29 = arith.addf %26, %28 : vector<8x32xf32>
    %30 = math.tanh %29 : vector<8x32xf32>
    %cst_14 = arith.constant 1.000000e+00 : f32
    %31 = vector.broadcast %cst_14 : f32 to vector<8x32xf32>
    %32 = arith.subf %31, %25 : vector<8x32xf32>
    %33 = arith.mulf %32, %30 : vector<8x32xf32>
    %34 = arith.mulf %25, %1 : vector<8x32xf32>
    %35 = arith.addf %33, %34 : vector<8x32xf32>
    %c0_15 = arith.constant 0 : index
    %c0_16 = arith.constant 0 : index
    %36 = vector.load %arg7[%c0_15, %c0_16] : memref<32x2xf32, #tpu.memory_space<vmem>>, vector<32x2xf32>
    %cst_17 = arith.constant dense<0.000000e+00> : vector<8x2xf32>
    %37 = tpu.matmul %35, %36, %cst_17 {dimension_numbers = #tpu.dot_dimension_numbers<[1], [0], [0], [1], [0, 0, 1, 1], [], []>} : vector<8x32xf32>, vector<32x2xf32>, vector<8x2xf32> -> vector<8x2xf32>
    %c0_18 = arith.constant 0 : index
    %c0_19 = arith.constant 0 : index
    %38 = vector.load %arg8[%c0_18, %c0_19] : memref<1x2xf32, #tpu.memory_space<vmem>>, vector<1x2xf32>
    %39 = vector.broadcast %38 : vector<1x2xf32> to vector<8x2xf32>
    %40 = arith.addf %37, %39 : vector<8x2xf32>
    %c0_20 = arith.constant 0 : index
    %c0_21 = arith.constant 0 : index
    %41 = vector.load %arg10[%c0_20, %c0_21] : memref<8x32xf32, #tpu.memory_space<vmem>>, vector<8x32xf32>
    tpu.vector_store %arg10[%c0_20, %c0_21], %35 {strides = array<i32>} : memref<8x32xf32, #tpu.memory_space<vmem>>, vector<8x32xf32>,
    %c0_22 = arith.constant 0 : index
    %c0_23 = arith.constant 0 : index
    %42 = vector.load %arg9[%c0_22, %c0_23] : memref<8x2xf32, #tpu.memory_space<vmem>>, vector<8x2xf32>
    tpu.vector_store %arg9[%c0_22, %c0_23], %40 {strides = array<i32>} : memref<8x2xf32, #tpu.memory_space<vmem>>, vector<8x2xf32>,
    return
  }
  func.func @transform_0(%arg0: i32) -> (i32, i32) {
    %c0_i32 = arith.constant 0 : i32
    %c0_i32_0 = arith.constant 0 : i32
    return %arg0, %c0_i32 : i32, i32
  }
  func.func @transform_1(%arg0: i32) -> (i32, i32) {
    %c0_i32 = arith.constant 0 : i32
    %c0_i32_0 = arith.constant 0 : i32
    return %arg0, %c0_i32 : i32, i32
  }
  func.func @transform_2(%arg0: i32) -> (i32, i32) {
    %c0_i32 = arith.constant 0 : i32
    %c0_i32_0 = arith.constant 0 : i32
    %c0_i32_1 = arith.constant 0 : i32
    return %c0_i32, %c0_i32_0 : i32, i32
  }
  func.func @transform_3(%arg0: i32) -> (i32, i32) {
    %c0_i32 = arith.constant 0 : i32
    %c0_i32_0 = arith.constant 0 : i32
    %c0_i32_1 = arith.constant 0 : i32
    return %c0_i32, %c0_i32_0 : i32, i32
  }
  func.func @transform_4(%arg0: i32) -> (i32, i32) {
    %c0_i32 = arith.constant 0 : i32
    %c0_i32_0 = arith.constant 0 : i32
    %c0_i32_1 = arith.constant 0 : i32
    return %c0_i32, %c0_i32_0 : i32, i32
  }
  func.func @transform_5(%arg0: i32) -> (i32, i32) {
    %c0_i32 = arith.constant 0 : i32
    %c0_i32_0 = arith.constant 0 : i32
    %c0_i32_1 = arith.constant 0 : i32
    return %c0_i32, %c0_i32_0 : i32, i32
  }
  func.func @transform_6(%arg0: i32) -> (i32, i32) {
    %c0_i32 = arith.constant 0 : i32
    %c0_i32_0 = arith.constant 0 : i32
    %c0_i32_1 = arith.constant 0 : i32
    return %c0_i32, %c0_i32_0 : i32, i32
  }
  func.func @transform_7(%arg0: i32) -> (i32, i32) {
    %c0_i32 = arith.constant 0 : i32
    %c0_i32_0 = arith.constant 0 : i32
    %c0_i32_1 = arith.constant 0 : i32
    return %c0_i32, %c0_i32_0 : i32, i32
  }
  func.func @transform_8(%arg0: i32) -> (i32, i32) {
    %c0_i32 = arith.constant 0 : i32
    %c0_i32_0 = arith.constant 0 : i32
    return %arg0, %c0_i32 : i32, i32
  }
  func.func @transform_9(%arg0: i32) -> (i32, i32) {
    %c0_i32 = arith.constant 0 : i32
    %c0_i32_0 = arith.constant 0 : i32
    return %arg0, %c0_i32 : i32, i32
  }
}

</mosaic_0001>

<llo_original>
// kernel: tpu_custom_call.1
$region0: #{tpu_custom_call.1}
  #allocation0 [shape = 'u32[]', space=smem, size = 0x4, offset = 0x4, fixed_abs, tag = 'smem constant byte address 0x4 - core index']
  #allocation1 [shape = 'u32[144,128]{1,0:T(1,128)}', space=vmem, size = 0x12000, scoped, tag = 'internal scratch']
  %s0 = inlined_call_operand.vmem [shape: f32[8,48], index: 0, kind: input, shape index: {}]
  %s1 = inlined_call_operand.vmem [shape: f32[8,32], index: 1, kind: input, shape index: {}]
  %s2 = inlined_call_operand.vmem [shape: f32[48,32], index: 2, kind: input, shape index: {}]
  %s3 = inlined_call_operand.vmem [shape: f32[1,32], index: 3, kind: input, shape index: {}]
  %s4 = inlined_call_operand.vmem [shape: f32[64,128], index: 4, kind: input, shape index: {}]
  %s5 = inlined_call_operand.vmem [shape: f32[1,128], index: 5, kind: input, shape index: {}]
  %s6 = inlined_call_operand.vmem [shape: f32[32,2], index: 6, kind: input, shape index: {}]
  %s7 = inlined_call_operand.vmem [shape: f32[1,2], index: 7, kind: input, shape index: {}]
  %s8 = inlined_call_operand.vmem [shape: f32[8,2], index: 8, kind: output, shape index: {0}]
  %s9 = inlined_call_operand.hbm [shape: f32[8,32], index: 9, kind: output, shape index: {1}]
  %10 = xla_tuple %s8, %s9
  %s11 = sld [smem:[#allocation0]]
  $region50: #{tpu_custom_call.1} parent=0
    _
  %s13 = ssub.s32 1, %s11
  %s14 = scalar_select 0, %s13, %s11
  $region1: #{tpu_custom_call.1} parent=0
    #allocation2 [shape = 'u8[4096]{0}', space=vmem, size = 0x1000, scoped, tag = 'output window, operand 1, single buffered']
    #allocation3 [shape = 's32[1]{0}', space=sflag, size = 0x4, scoped, tag = 'scoped memory for tpu_custom_call.1']
    %15 = vsyncpa [#allocation3], 0
    // Predicated region
    $region2: #{tpu_custom_call.1} parent=1 // pred_check
      _
    $region3: #{tpu_custom_call.1} parent=1 // pred_check_branch
      %17 = sbr.rel (0) target = $region5
    $region4: #{tpu_custom_call.1} parent=1 // pred_region
      _
    $region5: #{tpu_custom_call.1} parent=1 // pred_fallthru
      _
    // Predicated region
    $region6: #{tpu_custom_call.1} parent=1 // pred_check
      _
    $region7: #{tpu_custom_call.1} parent=1 // pred_check_branch
      %19 = sbr.rel (0) target = $region9
    $region8: #{tpu_custom_call.1} parent=1 // pred_region
      _
    $region9: #{tpu_custom_call.1} parent=1 // pred_fallthru
      _
    // Predicated region
    $region10: #{tpu_custom_call.1} parent=1 // pred_check
      _
    $region11: #{tpu_custom_call.1} parent=1 // pred_check_branch
      %21 = sbr.rel (0) target = $region13
    $region12: #{tpu_custom_call.1} parent=1 // pred_region
      _
    $region13: #{tpu_custom_call.1} parent=1 // pred_fallthru
      _
    // Predicated region
    $region14: #{tpu_custom_call.1} parent=1 // pred_check
      _
    $region15: #{tpu_custom_call.1} parent=1 // pred_check_branch
      %23 = sbr.rel (0) target = $region17
    $region16: #{tpu_custom_call.1} parent=1 // pred_region
      _
    $region17: #{tpu_custom_call.1} parent=1 // pred_fallthru
      _
    // Predicated region
    $region18: #{tpu_custom_call.1} parent=1 // pred_check
      _
    $region19: #{tpu_custom_call.1} parent=1 // pred_check_branch
      %25 = sbr.rel (0) target = $region21
    $region20: #{tpu_custom_call.1} parent=1 // pred_region
      _
    $region21: #{tpu_custom_call.1} parent=1 // pred_fallthru
      _
    // Predicated region
    $region22: #{tpu_custom_call.1} parent=1 // pred_check
      _
    $region23: #{tpu_custom_call.1} parent=1 // pred_check_branch
      %27 = sbr.rel (0) target = $region25
    $region24: #{tpu_custom_call.1} parent=1 // pred_region
      _
    $region25: #{tpu_custom_call.1} parent=1 // pred_fallthru
      _
    // Predicated region
    $region26: #{tpu_custom_call.1} parent=1 // pred_check
      _
    $region27: #{tpu_custom_call.1} parent=1 // pred_check_branch
      %29 = sbr.rel (0) target = $region29
    $region28: #{tpu_custom_call.1} parent=1 // pred_region
      _
    $region29: #{tpu_custom_call.1} parent=1 // pred_fallthru
      _
    // Predicated region
    $region30: #{tpu_custom_call.1} parent=1 // pred_check
      _
    $region31: #{tpu_custom_call.1} parent=1 // pred_check_branch
      %31 = sbr.rel (0) target = $region33
    $region32: #{tpu_custom_call.1} parent=1 // pred_region
      _
    $region33: #{tpu_custom_call.1} parent=1 // pred_fallthru
      _
    %v32 = vld [vmem:[%s0] sm:$0xff]
    %v33 = vld [vmem:[%s1] sm:$0xff]
    %v34 = vld [vmem:[%s2] sm:$0xff]
    %v35 = vld [vmem:[%s2 + $0x8] sm:$0xff]
    %v36 = vld [vmem:[%s2 + $0x10] sm:$0xff]
    %v37 = vld [vmem:[%s2 + $0x18] sm:$0xff]
    %v38 = vld [vmem:[%s2 + $0x20] sm:$0xff]
    %v39 = vld [vmem:[%s2 + $0x28] sm:$0xff]
    %v40 = vld [vmem:[%s3] sm:$0x1]
    %v42 = vlaneseq
    %v43 = vshrl.u32 %v42, 7
    %v44 = vsub.s32 0, %v43
    %v45 = vrot.slane %v40, %v44
    %vm47 = vcmask 392192
    %v49 = vsel %vm47, %v32, 0
    %51 = vmatprep.subr.mxu0 0.0
    %52 = vmatpush1.msra.mxu0 %v34
    %53 = vmatprep.subr.mxu0 0.0
    %54 = vmatpush1.msra.mxu0 %v35
    %55 = vmatprep.subr.mxu0 0.0
    %56 = vmatpush1.msra.mxu0 %v36
    %57 = vmatprep.subr.mxu0 0.0
    %58 = vmatpush1.msra.mxu0 %v37
    %59 = vmatprep.subr.mxu0 0.0
    %60 = vmatpush1.msra.mxu0 %v38
    %61 = vmatprep.subr.mxu0 0.0
    %62 = vmatpush1.msra.mxu0 %v39
    %63 = vmatprep.subr.mxu0 0.0
    %64 = vmatpush1.msra.mxu0 0.0
    %65 = vmatprep.subr.mxu0 0.0
    %66 = vmatpush1.msra.mxu0 0.0
    %67 = vmatprep.subr.mxu0 0.0
    %68 = vmatpush1.msra.mxu0 0.0
    %69 = vmatprep.subr.mxu0 0.0
    %70 = vmatpush1.msra.mxu0 0.0
    %71 = vmatprep.subr.mxu0 0.0
    %72 = vmatpush1.msra.mxu0 0.0
    %73 = vmatprep.subr.mxu0 0.0
    %74 = vmatpush1.msra.mxu0 0.0
    %75 = vmatprep.subr.mxu0 0.0
    %76 = vmatpush1.msra.mxu0 0.0
    %77 = vmatprep.subr.mxu0 0.0
    %78 = vmatpush1.msra.mxu0 0.0
    %79 = vmatprep.subr.mxu0 0.0
    %80 = vmatpush1.msra.mxu0 0.0
    %81 = vmatprep.subr.mxu0 0.0
    %82 = vmatpush1.msra.mxu0 0.0
    %83 = vmatprep.subr.mxu0 0.0
    %84 = vmatpush1.msra.mxu0 0.0
    %85 = vmatprep.subr.mxu0 0.0
    %86 = vmatpush1.msra.mxu0 0.0
    %87 = vmatprep.subr.mxu0 0.0
    %88 = vmatpush1.msra.mxu0 0.0
    %89 = vmatprep.subr.mxu0 0.0
    %90 = vmatpush1.msra.mxu0 0.0
    %91 = vmatprep.subr.mxu0 0.0
    %92 = vmatpush1.msra.mxu0 0.0
    %93 = vmatprep.subr.mxu0 0.0
    %94 = vmatpush1.msra.mxu0 0.0
    %95 = vmatprep.subr.mxu0 0.0
    %96 = vmatpush1.msra.mxu0 0.0
    %97 = vmatprep.subr.mxu0 0.0
    %98 = vmatpush1.msra.mxu0 0.0
    %99 = vmatprep.subr.mxu0 0.0
    %100 = vmatpush1.msra.mxu0 0.0
    %101 = vmatprep.subr.mxu0 0.0
    %102 = vmatpush1.msra.mxu0 0.0
    %103 = vmatprep.subr.mxu0 0.0
    %104 = vmatpush1.msra.mxu0 0.0
    %105 = vmatprep.subr.mxu0 0.0
    %106 = vmatpush1.msra.mxu0 0.0
    %107 = vmatprep.subr.mxu0 0.0
    %108 = vmatpush1.msra.mxu0 0.0
    %109 = vmatprep.subr.mxu0 0.0
    %110 = vmatpush1.msra.mxu0 0.0
    %111 = vmatprep.subr.mxu0 0.0
    %112 = vmatpush1.msra.mxu0 0.0
    %113 = vmatprep.subr.mxu0 0.0
    %114 = vmatpush1.msra.mxu0 0.0
    %115 = vmatprep.mubr.f32.mxu0 0.0
    %116 = vmatmul.mubr.f32.gmra.mrb[0].mxu0 %v49
    %v117 = vpop.f32.mrb[0].mxu0
    %v118 = vadd.f32 %v45, %v117
    %v119 = vpop.f32.mrb[0].mxu0
    %120 = vdwg.mxu0
    %v121 = vtanh.pop %v118
    %123 = vrot.lane.b32.xlu0 %v33, 32
    %v124 = vpop.permute.xlu0 %123
    %vm126 = vcmask 261120
    %v127 = vsel %vm126, %v121, %v124
    %v128 = vld [vmem:[%s4] sm:$0xff]
    %v129 = vld [vmem:[%s4 + $0x8] sm:$0xff]
    %v130 = vld [vmem:[%s4 + $0x10] sm:$0xff]
    %v131 = vld [vmem:[%s4 + $0x18] sm:$0xff]
    %v132 = vld [vmem:[%s4 + $0x20] sm:$0xff]
    %v133 = vld [vmem:[%s4 + $0x28] sm:$0xff]
    %v134 = vld [vmem:[%s4 + $0x30] sm:$0xff]
    %v135 = vld [vmem:[%s4 + $0x38] sm:$0xff]
    %v136 = vld [vmem:[%s5] sm:$0x1]
    %v138 = vlaneseq
    %v139 = vshrl.u32 %v138, 7
    %v140 = vsub.s32 0, %v139
    %v141 = vrot.slane %v136, %v140
    %vm143 = vcmask 523264
    %v145 = vsel %vm143, %v127, 0
    %147 = vmatprep.subr.mxu0 0.0
    %148 = vmatpush1.msra.mxu0 %v128
    %149 = vmatprep.subr.mxu0 0.0
    %150 = vmatpush1.msra.mxu0 %v129
    %151 = vmatprep.subr.mxu0 0.0
    %152 = vmatpush1.msra.mxu0 %v130
    %153 = vmatprep.subr.mxu0 0.0
    %154 = vmatpush1.msra.mxu0 %v131
    %155 = vmatprep.subr.mxu0 0.0
    %156 = vmatpush1.msra.mxu0 %v132
    %157 = vmatprep.subr.mxu0 0.0
    %158 = vmatpush1.msra.mxu0 %v133
    %159 = vmatprep.subr.mxu0 0.0
    %160 = vmatpush1.msra.mxu0 %v134
    %161 = vmatprep.subr.mxu0 0.0
    %162 = vmatpush1.msra.mxu0 %v135
    %163 = vmatprep.subr.mxu0 0.0
    %164 = vmatpush1.msra.mxu0 0.0
    %165 = vmatprep.subr.mxu0 0.0
    %166 = vmatpush1.msra.mxu0 0.0
    %167 = vmatprep.subr.mxu0 0.0
    %168 = vmatpush1.msra.mxu0 0.0
    %169 = vmatprep.subr.mxu0 0.0
    %170 = vmatpush1.msra.mxu0 0.0
    %171 = vmatprep.subr.mxu0 0.0
    %172 = vmatpush1.msra.mxu0 0.0
    %173 = vmatprep.subr.mxu0 0.0
    %174 = vmatpush1.msra.mxu0 0.0
    %175 = vmatprep.subr.mxu0 0.0
    %176 = vmatpush1.msra.mxu0 0.0
    %177 = vmatprep.subr.mxu0 0.0
    %178 = vmatpush1.msra.mxu0 0.0
    %179 = vmatprep.subr.mxu0 0.0
    %180 = vmatpush1.msra.mxu0 0.0
    %181 = vmatprep.subr.mxu0 0.0
    %182 = vmatpush1.msra.mxu0 0.0
    %183 = vmatprep.subr.mxu0 0.0
    %184 = vmatpush1.msra.mxu0 0.0
    %185 = vmatprep.subr.mxu0 0.0
    %186 = vmatpush1.msra.mxu0 0.0
    %187 = vmatprep.subr.mxu0 0.0
    %188 = vmatpush1.msra.mxu0 0.0
    %189 = vmatprep.subr.mxu0 0.0
    %190 = vmatpush1.msra.mxu0 0.0
    %191 = vmatprep.subr.mxu0 0.0
    %192 = vmatpush1.msra.mxu0 0.0
    %193 = vmatprep.subr.mxu0 0.0
    %194 = vmatpush1.msra.mxu0 0.0
    %195 = vmatprep.subr.mxu0 0.0
    %196 = vmatpush1.msra.mxu0 0.0
    %197 = vmatprep.subr.mxu0 0.0
    %198 = vmatpush1.msra.mxu0 0.0
    %199 = vmatprep.subr.mxu0 0.0
    %200 = vmatpush1.msra.mxu0 0.0
    %201 = vmatprep.subr.mxu0 0.0
    %202 = vmatpush1.msra.mxu0 0.0
    %203 = vmatprep.subr.mxu0 0.0
    %204 = vmatpush1.msra.mxu0 0.0
    %205 = vmatprep.subr.mxu0 0.0
    %206 = vmatpush1.msra.mxu0 0.0
    %207 = vmatprep.subr.mxu0 0.0
    %208 = vmatpush1.msra.mxu0 0.0
    %209 = vmatprep.subr.mxu0 0.0
    %210 = vmatpush1.msra.mxu0 0.0
    %211 = vmatprep.mubr.f32.mxu0 0.0
    %212 = vmatmul.mubr.f32.gmra.mrb[0].mxu0 %v145
    %v213 = vpop.f32.mrb[0].mxu0
    %v214 = vadd.f32 %v141, %v213
    %v215 = vpop.f32.mrb[0].mxu0
    %216 = vdwg.mxu0
    %v217 = vxor.u32 %v214, 2147483648
    %v218 = vmul.f32 %v217, 1.442695
    %v219 = vpow.pop %v218
    %v220 = vadd.f32 %v219, 1.0
    %v221 = vrcp.pop %v220
    %v222 = vmul.f32 1.0, %v221
    %224 = vrot.lane.b32.xlu0 %v214, 32
    %v225 = vpop.permute.xlu0 %224
    %v227 = vmul.f32 %v222, %v225
    %229 = vrot.lane.b32.xlu0 %v227, 64
    %v230 = vpop.permute.xlu0 %229
    %v232 = vadd.f32 %v214, %v230
    %v233 = vtanh.pop %v232
    %v234 = vsub.f32 1.0, %v222
    %236 = vrot.lane.b32.xlu0 %v233, 96
    %v237 = vpop.permute.xlu0 %236
    %v239 = vmul.f32 %v234, %v237
    %v240 = vmul.f32 %v222, %v124
    %v241 = vadd.f32 %v239, %v240
    %v242 = vld [vmem:[%s6] sm:$0xff]
    %v243 = vld [vmem:[%s6 + $0x8] sm:$0xff]
    %v244 = vld [vmem:[%s6 + $0x10] sm:$0xff]
    %v245 = vld [vmem:[%s6 + $0x18] sm:$0xff]
    %v246 = vld [vmem:[%s7] sm:$0x1]
    %v248 = vlaneseq
    %v249 = vshrl.u32 %v248, 7
    %v250 = vsub.s32 0, %v249
    %v251 = vrot.slane %v246, %v250
    %254 = vrot.lane.b32.xlu0 %v241, 96
    %v255 = vpop.permute.xlu0 %254
    %v256 = vsel %vm126, %v255, 0
    %258 = vmatprep.subr.mxu0 0.0
    %259 = vmatpush1.msra.mxu0 %v242
    %260 = vmatprep.subr.mxu0 0.0
    %261 = vmatpush1.msra.mxu0 %v243
    %262 = vmatprep.subr.mxu0 0.0
    %263 = vmatpush1.msra.mxu0 %v244
    %264 = vmatprep.subr.mxu0 0.0
    %265 = vmatpush1.msra.mxu0 %v245
    %266 = vmatprep.subr.mxu0 0.0
    %267 = vmatpush1.msra.mxu0 0.0
    %268 = vmatprep.subr.mxu0 0.0
    %269 = vmatpush1.msra.mxu0 0.0
    %270 = vmatprep.subr.mxu0 0.0
    %271 = vmatpush1.msra.mxu0 0.0
    %272 = vmatprep.subr.mxu0 0.0
    %273 = vmatpush1.msra.mxu0 0.0
    %274 = vmatprep.subr.mxu0 0.0
    %275 = vmatpush1.msra.mxu0 0.0
    %276 = vmatprep.subr.mxu0 0.0
    %277 = vmatpush1.msra.mxu0 0.0
    %278 = vmatprep.subr.mxu0 0.0
    %279 = vmatpush1.msra.mxu0 0.0
    %280 = vmatprep.subr.mxu0 0.0
    %281 = vmatpush1.msra.mxu0 0.0
    %282 = vmatprep.subr.mxu0 0.0
    %283 = vmatpush1.msra.mxu0 0.0
    %284 = vmatprep.subr.mxu0 0.0
    %285 = vmatpush1.msra.mxu0 0.0
    %286 = vmatprep.subr.mxu0 0.0
    %287 = vmatpush1.msra.mxu0 0.0
    %288 = vmatprep.subr.mxu0 0.0
    %289 = vmatpush1.msra.mxu0 0.0
    %290 = vmatprep.subr.mxu0 0.0
    %291 = vmatpush1.msra.mxu0 0.0
    %292 = vmatprep.subr.mxu0 0.0
    %293 = vmatpush1.msra.mxu0 0.0
    %294 = vmatprep.subr.mxu0 0.0
    %295 = vmatpush1.msra.mxu0 0.0
    %296 = vmatprep.subr.mxu0 0.0
    %297 = vmatpush1.msra.mxu0 0.0
    %298 = vmatprep.subr.mxu0 0.0
    %299 = vmatpush1.msra.mxu0 0.0
    %300 = vmatprep.subr.mxu0 0.0
    %301 = vmatpush1.msra.mxu0 0.0
    %302 = vmatprep.subr.mxu0 0.0
    %303 = vmatpush1.msra.mxu0 0.0
    %304 = vmatprep.subr.mxu0 0.0
    %305 = vmatpush1.msra.mxu0 0.0
    %306 = vmatprep.subr.mxu0 0.0
    %307 = vmatpush1.msra.mxu0 0.0
    %308 = vmatprep.subr.mxu0 0.0
    %309 = vmatpush1.msra.mxu0 0.0
    %310 = vmatprep.subr.mxu0 0.0
    %311 = vmatpush1.msra.mxu0 0.0
    %312 = vmatprep.subr.mxu0 0.0
    %313 = vmatpush1.msra.mxu0 0.0
    %314 = vmatprep.subr.mxu0 0.0
    %315 = vmatpush1.msra.mxu0 0.0
    %316 = vmatprep.subr.mxu0 0.0
    %317 = vmatpush1.msra.mxu0 0.0
    %318 = vmatprep.subr.mxu0 0.0
    %319 = vmatpush1.msra.mxu0 0.0
    %320 = vmatprep.subr.mxu0 0.0
    %321 = vmatpush1.msra.mxu0 0.0
    %322 = vmatprep.mubr.f32.mxu0 0.0
    %323 = vmatmul.mubr.f32.gmra.mrb[0].mxu0 %v256
    %v324 = vpop.f32.mrb[0].mxu0
    %v325 = vadd.f32 %v251, %v324
    %v326 = vpop.f32.mrb[0].mxu0
    %327 = vdwg.mxu0
    %329 = vst.msk [vmem:[#allocation2] sm:$0xff] %vm126, %v255
    %vm330 = vcmask 15360
    %331 = vst.msk [vmem:[%s8] sm:$0xff] %vm330, %v325
    // Predicated region
    $region34: #{tpu_custom_call.1} parent=1 // pred_check
      _
    $region35: #{tpu_custom_call.1} parent=1 // pred_check_branch
      %333 = sbr.rel (0) target = $region37
    $region36: #{tpu_custom_call.1} parent=1 // pred_region
      _
    $region37: #{tpu_custom_call.1} parent=1 // pred_fallthru
      _
    // Predicated region
    $region38: #{tpu_custom_call.1} parent=1 // pred_check
      _
    $region39: #{tpu_custom_call.1} parent=1 // pred_check_branch
      %335 = sbr.rel (0) target = $region41
    $region40: #{tpu_custom_call.1} parent=1 // pred_region
      %s337 = ssub.s32 128, 128
      %338 = vsyncadd [#allocation3], %s337
      %s340 = sshll.u32 [#allocation2], 4
      %s341 = int_to_ptr.vmem [resolvable:$true] %s340
      %343 = dma.vmem_to_hbm [thread:$0]  %s341, 128, %s9, [#allocation3]
    $region41: #{tpu_custom_call.1} parent=1 // pred_fallthru
      _
    // Predicated region
    $region42: #{tpu_custom_call.1} parent=1 // pred_check
      _
    $region43: #{tpu_custom_call.1} parent=1 // pred_check_branch
      %345 = sbr.rel (0) target = $region45
    $region44: #{tpu_custom_call.1} parent=1 // pred_region
      _
    $region45: #{tpu_custom_call.1} parent=1 // pred_fallthru
      _
    // Predicated region
    $region46: #{tpu_custom_call.1} parent=1 // pred_check
      _
    $region47: #{tpu_custom_call.1} parent=1 // pred_check_branch
      %347 = sbr.rel (0) target = $region49
    $region48: #{tpu_custom_call.1} parent=1 // pred_region
      %348 = dma.done [#allocation3], 128
    $region49: #{tpu_custom_call.1} parent=1 // pred_fallthru
      _
    %349 = vsyncpa [#allocation3], 1

</llo_original>
